<compile_context>
chip_gen: v5e
topology: v5e:2x2
jax: 0.10.0
libtpu: 0.0.40
codegen_flags: <defaults>
</compile_context>

<pallas_src>
import functools

import numpy as np
import jax
import jax.numpy as jnp
from jax import lax
from jax.experimental import pallas as pl
from jax.experimental.pallas import tpu as pltpu


def _round_up(x, m):
    return ((x + m - 1) // m) * m


# ---------------------------------------------------------------------------
# Generation-aware VMEM budget / tile plan
# ---------------------------------------------------------------------------
_VMEM_CAP = None


def _vmem_capacity():
    """Physical VMEM bytes per core (64 MiB on v7x, 128 MiB on v5e/v6e)."""
    global _VMEM_CAP
    if _VMEM_CAP is None:
        cap = 64 * 1024 * 1024
        try:
            info = pltpu.get_tpu_info()
            cap = int(getattr(info, "vmem_capacity_bytes", cap) or cap)
        except Exception:
            pass
        _VMEM_CAP = cap
    return _VMEM_CAP


def _vmem_limit_bytes():
    # ~48 MiB on v7x (64 MiB physical), up to 96 MiB on v5e/v6e (128 MiB).
    return min((_vmem_capacity() * 3) // 4, 96 * 1024 * 1024)


def _default_row_tile():
    # Bigger row tiles cut the re-streaming of the narrow (Np, HD) hop operand;
    # sized against the per-generation VMEM budget.
    return 2048 if _vmem_capacity() >= (100 << 20) else 1024


def _pick_tk(Kd, pref=512):
    """Contraction tile that divides Kd — never pad the contraction dim."""
    if Kd % pref == 0:
        return pref
    if Kd <= 2048:
        return Kd
    for cand in range(2048, 0, -128):
        if Kd % cand == 0:
            return cand
    # TODO(synk): pathological Kd with no multiple-of-128 divisor would need a
    # pad fallback; AGDN shapes (F_in, H*D, Np multiple of the row tile) never hit it.
    return Kd


# ---------------------------------------------------------------------------
# Tiled matmul: bf16 MXU inputs, f32 accumulation in VMEM scratch
# ---------------------------------------------------------------------------
def _matmul_kernel(a_ref, b_ref, o_ref, acc_ref):
    @pl.when(pl.program_id(1) == 0)
    def _zero():
        acc_ref[...] = jnp.zeros_like(acc_ref)

    acc_ref[...] += jnp.dot(a_ref[...], b_ref[...],
                            preferred_element_type=jnp.float32)

    @pl.when(pl.program_id(1) == pl.num_programs(1) - 1)
    def _store():
        o_ref[...] = acc_ref[...].astype(o_ref.dtype)


def tiled_matmul(a, b, *, out_dtype=jnp.bfloat16, tm=1024, tk=512):
    """C = A @ B, row/contraction tiled.  A:(M,K), B:(K,N); M % tm == 0 or M<=tm."""
    a = a.astype(jnp.bfloat16)
    b = b.astype(jnp.bfloat16)
    M, Kd = a.shape
    _, Nc = b.shape
    tm = M if M <= tm else tm
    assert M % tm == 0, (M, tm)
    tk = _pick_tk(Kd, tk)
    assert Kd % tk == 0, (Kd, tk)
    grid = (M // tm, Kd // tk)
    return pl.pallas_call(
        _matmul_kernel,
        out_shape=jax.ShapeDtypeStruct((M, Nc), out_dtype),
        grid=grid,
        in_specs=[pl.BlockSpec((tm, tk), lambda i, k: (i, k)),
                  pl.BlockSpec((tk, Nc), lambda i, k: (k, 0))],
        out_specs=pl.BlockSpec((tm, Nc), lambda i, k: (i, 0)),
        scratch_shapes=[pltpu.VMEM((tm, Nc), jnp.float32)],
        compiler_params=pltpu.CompilerParams(
            dimension_semantics=("parallel", "arbitrary"),
            vmem_limit_bytes=_vmem_limit_bytes()),
    )(a, b)


# ---------------------------------------------------------------------------
# Final diffusion hop fused with the hop-attention combine epilogue
#   acc = A_hat @ h_{K-1}   (f32 accumulation, k innermost / "arbitrary")
#   on the last k step: hop attention ('HA'), per-hop position embedding,
#   bias, then fused BN(inference)+ReLU (hidden) or head-mean (last layer).
# ---------------------------------------------------------------------------
def _diffuse_combine_kernel(*refs, K, H, D, is_last, use_bn,
                            negative_slope, eps, out_pad):
    a_ref, b_ref = refs[0], refs[1]
    hop_refs = refs[2:2 + K]                      # hops 0..K-1 (bf16)
    idx = 2 + K
    pos_ref, al_ref, ar_ref, bias_ref = refs[idx:idx + 4]
    idx += 4
    if use_bn:
        g_ref, beta_ref, mu_ref, var_ref = refs[idx:idx + 4]
        idx += 4
    o_ref, acc_ref = refs[idx], refs[idx + 1]

    @pl.when(pl.program_id(1) == 0)
    def _zero():
        acc_ref[...] = jnp.zeros_like(acc_ref)

    acc_ref[...] += jnp.dot(a_ref[...], b_ref[...],
                            preferred_element_type=jnp.float32)

    @pl.when(pl.program_id(1) == pl.num_programs(1) - 1)
    def _combine():
        nh = K + 1
        out_acc = None
        # Stream per-head slices (cast bf16->f32 on the fly) so the live f32
        # set stays ~ nh*tm*D instead of nh*tm*HD (no VMEM spills).
        for h in range(H):
            sl = slice(h * D, (h + 1) * D)
            al_h = al_ref[:, sl]
            ar_h = ar_ref[:, sl]
            hs = [hop_refs[k][:, sl].astype(jnp.float32) + pos_ref[k:k + 1, sl]
                  for k in range(K)]
            hs.append(acc_ref[:, sl] + pos_ref[K:K + 1, sl])   # hop K stays f32

            # Hop attention (weight_style='HA'):
            #   a_k = leaky_relu(<h_k, attn_l>_head + <h_0, attn_r>_head)
            a_r = jnp.sum(hs[0] * ar_h, axis=-1, keepdims=True)       # (tm, 1)
            logits = []
            for k in range(nh):
                z = jnp.sum(hs[k] * al_h, axis=-1, keepdims=True) + a_r
                logits.append(jnp.where(z >= 0.0, z, negative_slope * z))

            # Softmax over hops; approx reciprocal on the EUP (free slot).
            m = logits[0]
            for k in range(1, nh):
                m = jnp.maximum(m, logits[k])
            exps = [jnp.exp(l - m) for l in logits]
            denom = exps[0]
            for k in range(1, nh):
                denom = denom + exps[k]
            inv = pl.reciprocal(denom, approx=True)                   # (tm, 1)

            part = (exps[0] * inv) * hs[0]
            for k in range(1, nh):
                part = part + (exps[k] * inv) * hs[k]
            part = part + bias_ref[:, sl]

            if is_last:
                out_acc = part if out_acc is None else out_acc + part
            else:
                # flatten(1) == per-head column slices of the (tm, H*D) output;
                # fuse BatchNorm1d (inference stats) + ReLU here.
                if use_bn:
                    inv_std = lax.rsqrt(var_ref[:, sl] + eps)
                    part = (part - mu_ref[:, sl]) * inv_std * g_ref[:, sl] \
                           + beta_ref[:, sl]
                    part = jnp.maximum(part, 0.0)
                o_ref[:, sl] = part.astype(o_ref.dtype)

        if is_last:
            out = out_acc * (1.0 / H)                                 # head mean
            if out_pad:
                out = jnp.concatenate(
                    [out, jnp.zeros((out.shape[0], out_pad), jnp.float32)],
                    axis=-1)                                          # lane-dense store
            o_ref[...] = out.astype(o_ref.dtype)


def diffuse_combine(a_p, hk, hops, p, bn, *, n_heads, is_last, tm,
                    negative_slope=0.2):
    """Compute hop K = A_hat @ h_{K-1} and the AGDNConv combine in one kernel."""
    Np, HD = hops[0].shape
    K = len(hops)                      # hops 0..K-1 precomputed; hop K is the acc
    H = n_heads
    D = HD // H
    use_bn = bn is not None
    Kc = a_p.shape[1]                  # contraction dim (= Np)
    tk = _pick_tk(Kc)
    assert Np % tm == 0 and Kc % tk == 0, (Np, tm, Kc, tk)

    if is_last:
        out_dim = D                                  # = num_classes
        out_dim_p = max(_round_up(out_dim, 128), 128)
        out_pad = out_dim_p - out_dim
        out_dtype = jnp.float32
    else:
        out_dim_p = HD
        out_pad = 0
        out_dtype = jnp.bfloat16                     # next layer's fc wants bf16

    row_hd = pl.BlockSpec((tm, HD), lambda i, k: (i, 0))

    def full_spec(rows):
        return pl.BlockSpec((rows, HD), lambda i, k: (0, 0))

    in_specs = [pl.BlockSpec((tm, tk), lambda i, k: (i, k)),   # A_hat tile
                pl.BlockSpec((tk, HD), lambda i, k: (k, 0))]   # h_{K-1} (B operand)
    in_specs += [row_hd for _ in range(K)]                     # hops 0..K-1 (resident over k)
    in_specs += [full_spec(K + 1), full_spec(1), full_spec(1), full_spec(1)]
    args = [a_p.astype(jnp.bfloat16), hk.astype(jnp.bfloat16)] + list(hops)
    args += [p['pos'], p['attn_l'], p['attn_r'], p['bias']]
    if use_bn:
        in_specs += [full_spec(1)] * 4
        args += [bn['gamma'], bn['beta'], bn['mean'], bn['var']]

    kernel = functools.partial(
        _diffuse_combine_kernel, K=K, H=H, D=D, is_last=is_last, use_bn=use_bn,
        negative_slope=negative_slope, eps=1e-5, out_pad=out_pad)
    return pl.pallas_call(
        kernel,
        out_shape=jax.ShapeDtypeStruct((Np, out_dim_p), out_dtype),
        grid=(Np // tm, Kc // tk),
        in_specs=in_specs,
        out_specs=pl.BlockSpec((tm, out_dim_p), lambda i, k: (i, 0)),
        scratch_shapes=[pltpu.VMEM((tm, HD), jnp.float32)],
        compiler_params=pltpu.CompilerParams(
            dimension_semantics=("parallel", "arbitrary"),
            vmem_limit_bytes=_vmem_limit_bytes()),
    )(*args)


# ---------------------------------------------------------------------------
# Parameters (deterministic, in-script) and model forward
# ---------------------------------------------------------------------------
def make_agdn_params(key, in_feats, n_hidden, num_classes, n_layers, n_heads, K):
    convs, bns = [], []
    for i in range(n_layers):
        fin = in_feats if i == 0 else n_hidden * n_heads
        dout = n_hidden if i < n_layers - 1 else num_classes
        HD = n_heads * dout
        key, kw, kp, kl, kr = jax.random.split(key, 5)
        convs.append(dict(
            w=jax.random.normal(kw, (fin, HD), jnp.float32) * (1.4142 / np.sqrt(fin)),
            pos=jax.random.normal(kp, (K + 1, HD), jnp.float32) * 0.1,
            # NOTE: the reference module uses zero_inits=True for hop_attn_{l,r};
            # small random values are used here so the hop-softmax path is exercised.
            attn_l=jax.random.normal(kl, (1, HD), jnp.float32) * 0.1,
            attn_r=jax.random.normal(kr, (1, HD), jnp.float32) * 0.1,
            bias=jnp.zeros((1, HD), jnp.float32),
        ))
        if i < n_layers - 1:
            bns.append(dict(gamma=jnp.ones((1, HD), jnp.float32),
                            beta=jnp.zeros((1, HD), jnp.float32),
                            mean=jnp.zeros((1, HD), jnp.float32),
                            var=jnp.ones((1, HD), jnp.float32)))
    return convs, bns


def agdn_forward(a_hat, feat, convs, bns, *, K, n_heads):
    assert K >= 1
    N = feat.shape[0]
    # Tile plan: small graphs run as one full-row tile; large graphs use
    # 1024-row tiles (2048 on 128 MiB-VMEM parts), contraction tiles that
    # divide the padded node count, row axis "parallel" for megacore sharding.
    tm_big = _default_row_tile()
    if N <= tm_big:
        Np = _round_up(N, 8)
        tm_rows = Np
    else:
        tm_rows = tm_big
        Np = _round_up(N, tm_rows)
    pad = Np - N
    a_p = jnp.pad(a_hat, ((0, pad), (0, pad))).astype(jnp.bfloat16)
    h = jnp.pad(feat, ((0, pad), (0, 0))).astype(jnp.bfloat16)

    n_layers = len(convs)
    for i in range(n_layers):
        p = convs[i]
        is_last = (i == n_layers - 1)
        # fc (no bias): (Np, F_in) @ (F_in, H*D); contraction tile = F_in (no pad copy).
        h0 = tiled_matmul(h, p['w'], tm=tm_rows)
        # First K-1 diffusion hops: h_k = A_hat @ h_{k-1} (dense SpMM on the MXU).
        hops = [h0]
        hk = h0
        for _ in range(K - 1):
            hk = tiled_matmul(a_p, hk, tm=tm_rows)
            hops.append(hk)
        # Final hop fused with the hop-attention combine (+ bias, + fused
        # BatchNorm1d(inference)+ReLU for hidden layers, head-mean for last).
        h = diffuse_combine(a_p, hk, hops, p, None if is_last else bns[i],
                            n_heads=n_heads, is_last=is_last, tm=tm_rows)
        # No padded-row masking needed: padded rows/cols of A_hat are zero and
        # fc has no bias, so padded-row garbage never reaches real rows.
        # TODO(synk): F.dropout is the identity in inference (training=False).
    num_classes = convs[-1]['w'].shape[1] // n_heads
    return h[:N, :num_classes]


# ---------------------------------------------------------------------------
if __name__ == "__main__":
    N, in_feats, n_hidden, num_classes = 64, 32, 16, 8
    n_layers, n_heads, K = 2, 2, 3

    key = jax.random.PRNGKey(0)
    kf, kg, kp = jax.random.split(key, 3)

    feat = jax.random.normal(kf, (N, in_feats), jnp.float32)

    # Random undirected graph with self-loops, GCN-normalized dense adjacency.
    # TODO(synk): real ogbn-arxiv needs a sparse / paged adjacency formulation;
    # the dense A_hat here stands in for the gcn transition matrix.
    rnd = jax.random.uniform(kg, (N, N))
    adj = (rnd < 0.1).astype(jnp.float32)
    adj = jnp.maximum(adj, adj.T)
    adj = jnp.maximum(adj, jnp.eye(N, dtype=jnp.float32))
    deg = jnp.maximum(adj.sum(axis=1), 1.0)
    dinv = 1.0 / jnp.sqrt(deg)
    a_hat = adj * dinv[:, None] * dinv[None, :]

    convs, bns = make_agdn_params(kp, in_feats, n_hidden, num_classes,
                                  n_layers, n_heads, K)

    out = agdn_forward(a_hat, feat, convs, bns, K=K, n_heads=n_heads)
    out = jax.block_until_ready(out)
    assert out.shape == (N, num_classes), out.shape
    assert bool(jnp.all(jnp.isfinite(out)))
    print("KERNEL_OK")
</pallas_src>

<mosaic_0001>
module attributes {stable_mosaic.version = 11 : i64} {
  func.func @_matmul_kernel(%arg0: i32, %arg1: i32, %arg2: memref<64x32xbf16, #tpu.memory_space<vmem>>, %arg3: memref<32x32xbf16, #tpu.memory_space<vmem>>, %arg4: memref<64x32xbf16, #tpu.memory_space<vmem>>, %arg5: memref<64x32xf32, #tpu.memory_space<vmem>>) attributes {dimension_semantics = [#tpu.dimension_semantics<parallel>, #tpu.dimension_semantics<arbitrary>], iteration_bounds = array<i64: 1, 1>, scalar_prefetch = 0 : i64, scratch_operands = 1 : i64, tpu.core_type = #tpu.core_type<tc>, window_params = [{transform_indices = @transform_0, window_bounds = array<i64: 64, 32>}, {transform_indices = @transform_1, window_bounds = array<i64: 32, 32>}, {transform_indices = @transform_2, window_bounds = array<i64: 64, 32>}]} {
    %c0_i32 = arith.constant 0 : i32
    %0 = arith.cmpi eq, %arg1, %c0_i32 : i32
    %1 = arith.extui %0 : i1 to i32
    %c0_i32_0 = arith.constant 0 : i32
    %2 = arith.cmpi ne, %1, %c0_i32_0 : i32
    scf.if %2 {
      %cst_10 = arith.constant 0.000000e+00 : f32
      %12 = vector.broadcast %cst_10 : f32 to vector<64x32xf32>
      %c0_11 = arith.constant 0 : index
      %c0_12 = arith.constant 0 : index
      %13 = vector.load %arg5[%c0_11, %c0_12] : memref<64x32xf32, #tpu.memory_space<vmem>>, vector<64x32xf32>
      tpu.vector_store %arg5[%c0_11, %c0_12], %12 {strides = array<i32>} : memref<64x32xf32, #tpu.memory_space<vmem>>, vector<64x32xf32>,
    } else {
    }
    %c0 = arith.constant 0 : index
    %c0_1 = arith.constant 0 : index
    %3 = vector.load %arg5[%c0, %c0_1] : memref<64x32xf32, #tpu.memory_space<vmem>>, vector<64x32xf32>
    %c0_2 = arith.constant 0 : index
    %c0_3 = arith.constant 0 : index
    %4 = vector.load %arg2[%c0_2, %c0_3] : memref<64x32xbf16, #tpu.memory_space<vmem>>, vector<64x32xbf16>
    %c0_4 = arith.constant 0 : index
    %c0_5 = arith.constant 0 : index
    %5 = vector.load %arg3[%c0_4, %c0_5] : memref<32x32xbf16, #tpu.memory_space<vmem>>, vector<32x32xbf16>
    %cst = arith.constant dense<0.000000e+00> : vector<64x32xf32>
    %6 = tpu.matmul %4, %5, %cst {dimension_numbers = #tpu.dot_dimension_numbers<[1], [0], [0], [1], [0, 0, 1, 1], [], []>} : vector<64x32xbf16>, vector<32x32xbf16>, vector<64x32xf32> -> vector<64x32xf32>
    %7 = arith.addf %3, %6 : vector<64x32xf32>
    %c0_6 = arith.constant 0 : index
    %c0_7 = arith.constant 0 : index
    %8 = vector.load %arg5[%c0_6, %c0_7] : memref<64x32xf32, #tpu.memory_space<vmem>>, vector<64x32xf32>
    tpu.vector_store %arg5[%c0_6, %c0_7], %7 {strides = array<i32>} : memref<64x32xf32, #tpu.memory_space<vmem>>, vector<64x32xf32>,
    %c0_i32_8 = arith.constant 0 : i32
    %9 = arith.cmpi eq, %arg1, %c0_i32_8 : i32
    %10 = arith.extui %9 : i1 to i32
    %c0_i32_9 = arith.constant 0 : i32
    %11 = arith.cmpi ne, %10, %c0_i32_9 : i32
    scf.if %11 {
      %c0_10 = arith.constant 0 : index
      %c0_11 = arith.constant 0 : index
      %12 = vector.load %arg5[%c0_10, %c0_11] : memref<64x32xf32, #tpu.memory_space<vmem>>, vector<64x32xf32>
      %13 = arith.truncf %12 : vector<64x32xf32> to vector<64x32xbf16>
      %c0_12 = arith.constant 0 : index
      %c0_13 = arith.constant 0 : index
      %14 = vector.load %arg4[%c0_12, %c0_13] : memref<64x32xbf16, #tpu.memory_space<vmem>>, vector<64x32xbf16>
      tpu.vector_store %arg4[%c0_12, %c0_13], %13 {strides = array<i32>} : memref<64x32xbf16, #tpu.memory_space<vmem>>, vector<64x32xbf16>,
    } else {
    }
    return
  }
  func.func @transform_0(%arg0: i32, %arg1: i32) -> (i32, i32) {
    %c0_i32 = arith.constant 0 : i32
    return %arg0, %arg1 : i32, i32
  }
  func.func @transform_1(%arg0: i32, %arg1: i32) -> (i32, i32) {
    %c0_i32 = arith.constant 0 : i32
    %c0_i32_0 = arith.constant 0 : i32
    return %arg1, %c0_i32 : i32, i32
  }
  func.func @transform_2(%arg0: i32, %arg1: i32) -> (i32, i32) {
    %c0_i32 = arith.constant 0 : i32
    %c0_i32_0 = arith.constant 0 : i32
    return %arg0, %c0_i32 : i32, i32
  }
}

</mosaic_0001>

<llo_original>
// kernel: tpu_custom_call.1
$region0: #{tpu_custom_call.1}
  #allocation0 [shape = 'u32[]', space=smem, size = 0x4, offset = 0x4, fixed_abs, tag = 'smem constant byte address 0x4 - core index']
  #allocation1 [shape = 'u32[72,128]{1,0:T(1,128)}', space=vmem, size = 0x9000, scoped, tag = 'internal scratch']
  #allocation2 [shape = 'f32[64,32]{1,0:T(8,128)}', space=vmem, size = 0x8000, scoped, tag = 'scratch operand']
  %s0 = inlined_call_operand.vmem [shape: bf16[64,32], index: 0, kind: input, shape index: {}]
  %s1 = inlined_call_operand.vmem [shape: bf16[32,32], index: 1, kind: input, shape index: {}]
  %s2 = inlined_call_operand.vmem [shape: bf16[64,32], index: 2, kind: output, shape index: {}]
  %s3 = sld [smem:[#allocation0]]
  $region26: #{tpu_custom_call.1} parent=0
    _
  %s5 = ssub.s32 1, %s3
  %s6 = scalar_select 0, %s5, %s3
  // Predicated region
  $region2: #{tpu_custom_call.1} parent=0 // pred_check
    _
  $region3: #{tpu_custom_call.1} parent=0 // pred_check_branch
    %8 = sbr.rel (0) target = $region5
  $region4: #{tpu_custom_call.1} parent=0 // pred_region
    _
  $region5: #{tpu_custom_call.1} parent=0 // pred_fallthru
    _
  // Predicated region
  $region6: #{tpu_custom_call.1} parent=0 // pred_check
    _
  $region7: #{tpu_custom_call.1} parent=0 // pred_check_branch
    %10 = sbr.rel (0) target = $region9
  $region8: #{tpu_custom_call.1} parent=0 // pred_region
    _
  $region9: #{tpu_custom_call.1} parent=0 // pred_fallthru
    _
  %p12 = scmp.eq.s32.totalorder 0, 0
  // Predicated region
  $region10: #{tpu_custom_call.1} parent=0 // pred_check
    %p13 = pneg %p12
  $region11: #{tpu_custom_call.1} parent=0 // pred_check_branch
    %15 = sbr.rel (%p13) target = $region13
  $region12: #{tpu_custom_call.1} parent=0 // pred_region
    %vm16 = vcmask 261120
    %17 = vst.msk [vmem:[#allocation2] sm:$0xff] %vm16, 0.0
    %18 = vst.msk [vmem:[#allocation2 + $0x8] sm:$0xff] %vm16, 0.0
    %19 = vst.msk [vmem:[#allocation2 + $0x10] sm:$0xff] %vm16, 0.0
    %20 = vst.msk [vmem:[#allocation2 + $0x18] sm:$0xff] %vm16, 0.0
    %21 = vst.msk [vmem:[#allocation2 + $0x20] sm:$0xff] %vm16, 0.0
    %22 = vst.msk [vmem:[#allocation2 + $0x28] sm:$0xff] %vm16, 0.0
    %23 = vst.msk [vmem:[#allocation2 + $0x30] sm:$0xff] %vm16, 0.0
    %24 = vst.msk [vmem:[#allocation2 + $0x38] sm:$0xff] %vm16, 0.0
  $region13: #{tpu_custom_call.1} parent=0 // pred_fallthru
    _
  %v25 = vld [vmem:[#allocation2] sm:$0xff]
  %v26 = vld [vmem:[#allocation2 + $0x8] sm:$0xff]
  %v27 = vld [vmem:[#allocation2 + $0x10] sm:$0xff]
  %v28 = vld [vmem:[#allocation2 + $0x18] sm:$0xff]
  %v29 = vld [vmem:[#allocation2 + $0x20] sm:$0xff]
  %v30 = vld [vmem:[#allocation2 + $0x28] sm:$0xff]
  %v31 = vld [vmem:[#allocation2 + $0x30] sm:$0xff]
  %v32 = vld [vmem:[#allocation2 + $0x38] sm:$0xff]
  %v33 = vld [vmem:[%s0] sm:$0xf]
  %v34 = vld [vmem:[%s0 + $0x4] sm:$0xf]
  %v35 = vld [vmem:[%s0 + $0x8] sm:$0xf]
  %v36 = vld [vmem:[%s0 + $0xc] sm:$0xf]
  %v37 = vld [vmem:[%s0 + $0x10] sm:$0xf]
  %v38 = vld [vmem:[%s0 + $0x14] sm:$0xf]
  %v39 = vld [vmem:[%s0 + $0x18] sm:$0xf]
  %v40 = vld [vmem:[%s0 + $0x1c] sm:$0xf]
  %v41 = vld [vmem:[%s1] sm:$0xf]
  %v42 = vld [vmem:[%s1 + $0x4] sm:$0xf]
  %v43 = vld [vmem:[%s1 + $0x8] sm:$0xf]
  %v44 = vld [vmem:[%s1 + $0xc] sm:$0xf]
  %v53 = vunpack.c.l.b16 %v33
  %v54 = vunpack.c.l.b16 %v34
  %v55 = vunpack.c.l.b16 %v35
  %v56 = vunpack.c.l.b16 %v36
  %v57 = vunpack.c.l.b16 %v37
  %v58 = vunpack.c.l.b16 %v38
  %v59 = vunpack.c.l.b16 %v39
  %v60 = vunpack.c.l.b16 %v40
  %v61 = vpack.c.b16 %v54, %v53
  %v62 = vpack.c.b16 %v56, %v55
  %v63 = vpack.c.b16 %v58, %v57
  %v64 = vpack.c.b16 %v60, %v59
  %v69 = vunpack.c.l.b16 %v41
  %v70 = vunpack.c.l.b16 %v42
  %v71 = vunpack.c.l.b16 %v43
  %v72 = vunpack.c.l.b16 %v44
  %v73 = vpack.c.b16 %v70, %v69
  %v74 = vpack.c.b16 %v72, %v71
  %vm77 = vcmask 261120
  %v79 = vsel %vm77, %v61, 0
  %v82 = vsel %vm77, %v62, 0
  %v85 = vsel %vm77, %v63, 0
  %v88 = vsel %vm77, %v64, 0
  %90 = vmatpush.bf16.msra.mxu0 0
  %91 = vmatpush.bf16.msra.mxu0 0
  %92 = vmatpush.bf16.msra.mxu0 0
  %93 = vmatpush.bf16.msra.mxu0 0
  %94 = vmatpush.bf16.msra.mxu0 0
  %95 = vmatpush.bf16.msra.mxu0 0
  %96 = vmatpush.bf16.msra.mxu0 %v74
  %97 = vmatpush.bf16.msra.mxu0 %v73
  %98 = vmatmul.bf16.gmra.mxu0 %v79
  %v99 = vpop.f32.mrf.mxu0
  %v100 = vadd.f32 0.0, %v99
  %v101 = vpop.f32.mrf.mxu0
  %v102 = vadd.f32 0.0, %v101
  %103 = vmatmul.bf16.gmra.mxu0 %v82
  %v104 = vpop.f32.mrf.mxu0
  %v105 = vadd.f32 0.0, %v104
  %v106 = vpop.f32.mrf.mxu0
  %v107 = vadd.f32 0.0, %v106
  %108 = vmatmul.bf16.gmra.mxu0 %v85
  %v109 = vpop.f32.mrf.mxu0
  %v110 = vadd.f32 0.0, %v109
  %v111 = vpop.f32.mrf.mxu0
  %v112 = vadd.f32 0.0, %v111
  %113 = vmatmul.bf16.gmra.mxu0 %v88
  %v114 = vpop.f32.mrf.mxu0
  %v115 = vadd.f32 0.0, %v114
  %v116 = vpop.f32.mrf.mxu0
  %v117 = vadd.f32 0.0, %v116
  %118 = vdwg.mxu0
  %v119 = vadd.f32 %v25, %v100
  %v120 = vadd.f32 %v26, %v102
  %v121 = vadd.f32 %v27, %v105
  %v122 = vadd.f32 %v28, %v107
  %v123 = vadd.f32 %v29, %v110
  %v124 = vadd.f32 %v30, %v112
  %v125 = vadd.f32 %v31, %v115
  %v126 = vadd.f32 %v32, %v117
  %127 = vst.msk [vmem:[#allocation2] sm:$0xff] %vm77, %v119
  %128 = vst.msk [vmem:[#allocation2 + $0x8] sm:$0xff] %vm77, %v120
  %129 = vst.msk [vmem:[#allocation2 + $0x10] sm:$0xff] %vm77, %v121
  %130 = vst.msk [vmem:[#allocation2 + $0x18] sm:$0xff] %vm77, %v122
  %131 = vst.msk [vmem:[#allocation2 + $0x20] sm:$0xff] %vm77, %v123
  %132 = vst.msk [vmem:[#allocation2 + $0x28] sm:$0xff] %vm77, %v124
  %133 = vst.msk [vmem:[#allocation2 + $0x30] sm:$0xff] %vm77, %v125
  %134 = vst.msk [vmem:[#allocation2 + $0x38] sm:$0xff] %vm77, %v126
  // Predicated region
  $region14: #{tpu_custom_call.1} parent=0 // pred_check
    %p135 = pneg %p12
  $region15: #{tpu_custom_call.1} parent=0 // pred_check_branch
    %137 = sbr.rel (%p135) target = $region17
  $region16: #{tpu_custom_call.1} parent=0 // pred_region
    %v138 = vld [vmem:[#allocation2] sm:$0xff]
    %v139 = vld [vmem:[#allocation2 + $0x8] sm:$0xff]
    %v140 = vld [vmem:[#allocation2 + $0x10] sm:$0xff]
    %v141 = vld [vmem:[#allocation2 + $0x18] sm:$0xff]
    %v142 = vld [vmem:[#allocation2 + $0x20] sm:$0xff]
    %v143 = vld [vmem:[#allocation2 + $0x28] sm:$0xff]
    %v144 = vld [vmem:[#allocation2 + $0x30] sm:$0xff]
    %v145 = vld [vmem:[#allocation2 + $0x38] sm:$0xff]
    %v146 = vpack.c.bf16 %v138, %v138
    %v147 = vpack.c.bf16 %v139, %v139
    %v148 = vpack.c.bf16 %v140, %v140
    %v149 = vpack.c.bf16 %v141, %v141
    %v150 = vpack.c.bf16 %v142, %v142
    %v151 = vpack.c.bf16 %v143, %v143
    %v152 = vpack.c.bf16 %v144, %v144
    %v153 = vpack.c.bf16 %v145, %v145
    %vm154 = vcmask 257024
    %155 = vst.msk [vmem:[%s2] sm:$0xf] %vm154, %v146
    %156 = vst.msk [vmem:[%s2 + $0x4] sm:$0xf] %vm154, %v147
    %157 = vst.msk [vmem:[%s2 + $0x8] sm:$0xf] %vm154, %v148
    %158 = vst.msk [vmem:[%s2 + $0xc] sm:$0xf] %vm154, %v149
    %159 = vst.msk [vmem:[%s2 + $0x10] sm:$0xf] %vm154, %v150
    %160 = vst.msk [vmem:[%s2 + $0x14] sm:$0xf] %vm154, %v151
    %161 = vst.msk [vmem:[%s2 + $0x18] sm:$0xf] %vm154, %v152
    %162 = vst.msk [vmem:[%s2 + $0x1c] sm:$0xf] %vm154, %v153
  $region17: #{tpu_custom_call.1} parent=0 // pred_fallthru
    _
  // Predicated region
  $region18: #{tpu_custom_call.1} parent=0 // pred_check
    _
  $region19: #{tpu_custom_call.1} parent=0 // pred_check_branch
    %164 = sbr.rel (0) target = $region21
  $region20: #{tpu_custom_call.1} parent=0 // pred_region
    _
  $region21: #{tpu_custom_call.1} parent=0 // pred_fallthru
    _
  // Predicated region
  $region22: #{tpu_custom_call.1} parent=0 // pred_check
    _
  $region23: #{tpu_custom_call.1} parent=0 // pred_check_branch
    %166 = sbr.rel (0) target = $region25
  $region24: #{tpu_custom_call.1} parent=0 // pred_region
    _
  $region25: #{tpu_custom_call.1} parent=0 // pred_fallthru
    _

</llo_original>
